<compile_context>
chip_gen: v7x
topology: tpu7x:2x2x1
jax: 0.10.0
libtpu: 0.0.40
codegen_flags: <defaults>
</compile_context>

<pallas_src>
import functools

import numpy as np
import jax
import jax.numpy as jnp
from jax import lax
from jax.experimental import pallas as pl
from jax.experimental.pallas import tpu as pltpu


def _round_up(x, m):
    return ((x + m - 1) // m) * m


# ----------------------------------------------------------------------------
# Anchor generation (host-side numpy glue, identical to the PyTorch reference).
# ----------------------------------------------------------------------------
def generate_anchor_base(base_size=16, ratios=(0.5, 1, 2), anchor_scales=(8, 16, 32)):
    py = base_size / 2.0
    px = base_size / 2.0
    anchor_base = np.zeros((len(ratios) * len(anchor_scales), 4), dtype=np.float32)
    for i, r in enumerate(ratios):
        for j, s in enumerate(anchor_scales):
            h = base_size * s * np.sqrt(r)
            w = base_size * s * np.sqrt(1.0 / r)
            idx = i * len(anchor_scales) + j
            anchor_base[idx, 0] = py - h / 2.0
            anchor_base[idx, 1] = px - w / 2.0
            anchor_base[idx, 2] = py + h / 2.0
            anchor_base[idx, 3] = px + w / 2.0
    return anchor_base


def _enumerate_shifted_anchor(anchor_base, feat_stride, height, width):
    shift_y = np.arange(0, height * feat_stride, feat_stride)
    shift_x = np.arange(0, width * feat_stride, feat_stride)
    shift_x, shift_y = np.meshgrid(shift_x, shift_y)
    shift = np.stack(
        (shift_y.ravel(), shift_x.ravel(), shift_y.ravel(), shift_x.ravel()), axis=1
    )
    A = anchor_base.shape[0]
    K = shift.shape[0]
    anchor = anchor_base.reshape((1, A, 4)) + shift.reshape((1, K, 4)).transpose((1, 0, 2))
    anchor = anchor.reshape((K * A, 4)).astype(np.float32)
    return anchor


# ----------------------------------------------------------------------------
# Pallas kernel: on-chip im2col + conv3x3 matmul + ReLU + fused 1x1 heads
#                + fg sigmoid, one lane-dense bf16 output slab per row tile.
# Grid = (batch, row_tiles).  The whole padded image of batch element b stays
# resident in VMEM across the row-tile axis (its block index ignores t).
# ----------------------------------------------------------------------------
def rpn_fused_kernel(
    x_ref,    # (Hp, Wp, Cin)    bf16   whole padded image of this batch element
    w1_ref,   # (9*Cin, Cmid_p)  bf16   3x3 conv weights, tap-major rows
    b1_ref,   # (1, Cmid_p)      f32
    wh_ref,   # (Cmid_p, P)      bf16   fused head weights [loc | score | fg-delta | 0]
    bh_ref,   # (1, P)           f32
    out_ref,  # (th*out_w, P)    bf16   [loc(4A) | score(2A) | fg_prob(A) | pad]
    *,
    th,
    out_w,
    cin,
    n_anchor,
):
    t = pl.program_id(1)
    row0 = t * th

    # On-chip im2col: 3 haloed row bands x 3 width shifts -> (th, out_w, 9*Cin).
    # Assembly is done in f32 (simple (8,128)-tiled relayouts); values are
    # already bf16-quantized so the round-trip cast is lossless.
    taps = []
    for dy in range(3):
        band = x_ref[pl.ds(row0 + dy, th), :, :].astype(jnp.float32)  # (th, Wp, Cin)
        for dx in range(3):
            taps.append(band[:, dx:dx + out_w, :])                     # (th, out_w, Cin)
    patches = jnp.concatenate(taps, axis=-1).reshape(th * out_w, 9 * cin)

    # conv3x3 as ONE K = 9*Cin MXU matmul (bf16 operands, f32 accumulation).
    acc = jnp.dot(patches.astype(w1_ref.dtype), w1_ref[...],
                  preferred_element_type=jnp.float32)
    h = jnp.maximum(acc + b1_ref[...], 0.0)            # bias + ReLU in f32 (VPU)

    # Fused, lane-dense 1x1 heads: one (rows, Cmid_p) x (Cmid_p, P=128) matmul.
    head = jnp.dot(h.astype(wh_ref.dtype), wh_ref[...],
                   preferred_element_type=jnp.float32) + bh_ref[...]

    # Columns [6A, 7A) carry (fg - bg) logits; 2-class softmax foreground prob
    # equals sigmoid(fg - bg).  (1, P) column mask broadcasts over rows, so the
    # writeback stays a single lane-dense store.
    cols = lax.broadcasted_iota(jnp.int32, (1, head.shape[-1]), 1)
    fg_cols = (cols >= 6 * n_anchor) & (cols < 7 * n_anchor)
    out_ref[...] = jnp.where(fg_cols, jax.nn.sigmoid(head), head).astype(out_ref.dtype)


# ----------------------------------------------------------------------------
# JAX-side RPN module.
# ----------------------------------------------------------------------------
class RegionProposalNetworkPallas:
    def __init__(
        self,
        in_channels=16,
        mid_channels=32,
        ratios=(0.5, 1, 2),
        anchor_scales=(8, 16, 32),
        feat_stride=16,
        seed=0,
        compute_dtype=jnp.bfloat16,
        row_tile=2048,
    ):
        self.anchor_base = generate_anchor_base(
            anchor_scales=anchor_scales, ratios=ratios
        )
        self.feat_stride = feat_stride
        self.in_channels = in_channels
        self.mid_channels = mid_channels
        self.compute_dtype = compute_dtype
        self.row_tile = row_tile
        n_anchor = self.anchor_base.shape[0]
        self.n_anchor = n_anchor

        # Deterministic normal(0, 0.01) weight init, zero bias (normal_init).
        key = jax.random.PRNGKey(seed)
        k1, k2, k3 = jax.random.split(key, 3)
        std = 0.01
        # PyTorch shapes: (out, in, kh, kw)
        self.w_conv1 = (
            jax.random.normal(k1, (mid_channels, in_channels, 3, 3), jnp.float32) * std
        )
        self.b_conv1 = jnp.zeros((mid_channels,), jnp.float32)
        self.w_score = (
            jax.random.normal(k2, (n_anchor * 2, mid_channels, 1, 1), jnp.float32) * std
        )
        self.b_score = jnp.zeros((n_anchor * 2,), jnp.float32)
        self.w_loc = (
            jax.random.normal(k3, (n_anchor * 4, mid_channels, 1, 1), jnp.float32) * std
        )
        self.b_loc = jnp.zeros((n_anchor * 4,), jnp.float32)

    # --- parameter repacking (plain-JAX glue) ---------------------------------
    def _packed_params(self):
        Cin, Cmid, A = self.in_channels, self.mid_channels, self.n_anchor
        cdt = self.compute_dtype
        Cmid_p = _round_up(Cmid, 128)       # lane-dense hidden activation
        P = _round_up(7 * A, 128)           # lane-dense fused head output
        # (Cmid, Cin, 3, 3) -> (kh, kw, Cin, Cmid) -> (9*Cin, Cmid);
        # row index = (dy*3 + dx)*Cin + cin, matching the in-kernel tap order.
        w1 = jnp.transpose(self.w_conv1, (2, 3, 1, 0)).reshape(9 * Cin, Cmid)
        w1 = jnp.pad(w1, ((0, 0), (0, Cmid_p - Cmid)))
        b1 = jnp.pad(self.b_conv1.reshape(1, Cmid), ((0, 0), (0, Cmid_p - Cmid)))
        wl = jnp.transpose(self.w_loc.reshape(4 * A, Cmid), (1, 0))     # (Cmid, 4A)
        bl = self.b_loc.reshape(1, 4 * A)
        ws = jnp.transpose(self.w_score.reshape(2 * A, Cmid), (1, 0))   # (Cmid, 2A)
        bs = self.b_score.reshape(1, 2 * A)
        # fg-minus-bg delta: softmax([bg, fg])[1] == sigmoid(fg - bg).
        wd = ws[:, 1::2] - ws[:, 0::2]                                   # (Cmid, A)
        bd = bs[:, 1::2] - bs[:, 0::2]                                   # (1, A)
        wh = jnp.concatenate([wl, ws, wd], axis=1)                       # (Cmid, 7A)
        wh = jnp.pad(wh, ((0, Cmid_p - Cmid), (0, P - 7 * A)))
        bh = jnp.pad(jnp.concatenate([bl, bs, bd], axis=1),
                     ((0, 0), (0, P - 7 * A)))
        return (w1.astype(cdt), b1.astype(jnp.float32),
                wh.astype(cdt), bh.astype(jnp.float32), Cmid_p, P)

    # --- forward ---------------------------------------------------------------
    def forward(self, x_nchw, img_size, scale=1.0):
        del img_size, scale  # only consumed by the (host-side) proposal layer
        n, c, hh, ww = x_nchw.shape
        assert c == self.in_channels
        A = self.n_anchor
        Cin = self.in_channels

        anchor = _enumerate_shifted_anchor(
            np.array(self.anchor_base), self.feat_stride, hh, ww
        )
        w1, b1, wh, bh, Cmid_p, P = self._packed_params()

        # --- row-tile selection -------------------------------------------------
        th = min(hh, max(1, self.row_tile // max(ww, 1)))   # image rows per step
        if n == 1 and th >= hh and hh >= 2:
            th = (hh + 1) // 2      # keep >= 2 grid steps so both v7x TCs run
        while (th * ww) % 16 != 0:  # bf16 sublane packing for the row dimension
            th += 1
        T = -(-hh // th)
        h_eff = T * th
        hp, wp = h_eff + 2, ww + 2
        rows_per_step = th * ww

        # --- padded NHWC input (1-pixel halo), built directly in bf16 ------------
        # TODO(synk): for feature maps too large to keep one padded image resident
        # in VMEM, switch to a manually double-buffered haloed-row-band DMA.
        x_nhwc = jnp.transpose(x_nchw, (0, 2, 3, 1)).astype(self.compute_dtype)
        x_pad = jnp.pad(x_nhwc, ((0, 0), (1, hp - 1 - hh), (1, 1), (0, 0)))
        x_pad = x_pad.reshape(n * hp, wp, Cin)   # batch folded into dim 0

        kernel = functools.partial(
            rpn_fused_kernel, th=th, out_w=ww, cin=Cin, n_anchor=A
        )
        full2d = lambda shape: pl.BlockSpec(shape, lambda b, t: (0, 0))

        out = pl.pallas_call(
            kernel,
            out_shape=jax.ShapeDtypeStruct(
                (n * T * rows_per_step, P), self.compute_dtype
            ),
            grid_spec=pltpu.PrefetchScalarGridSpec(
                num_scalar_prefetch=0,
                grid=(n, T),
                in_specs=[
                    # whole padded image of batch b; resident across the t axis.
                    pl.BlockSpec((hp, wp, Cin), lambda b, t: (b, 0, 0)),
                    full2d((9 * Cin, Cmid_p)),   # resident weights
                    full2d((1, Cmid_p)),
                    full2d((Cmid_p, P)),
                    full2d((1, P)),
                ],
                out_specs=pl.BlockSpec(
                    (rows_per_step, P), lambda b, t: (b * T + t, 0)
                ),
            ),
            compiler_params=pltpu.CompilerParams(
                dimension_semantics=("parallel", "parallel"),
                vmem_limit_bytes=48 * 1024 * 1024,
            ),
        )(x_pad, w1, b1, wh, bh)

        # Split the fused bf16 output slab (plain-JAX layout plumbing).
        out = out.reshape(n, T * rows_per_step, P)[:, : hh * ww, :].astype(jnp.float32)
        rpn_locs = out[:, :, : 4 * A].reshape(n, hh * ww * A, 4)
        rpn_scores = out[:, :, 4 * A: 6 * A].reshape(n, hh * ww * A, 2)
        rpn_fg_scores = out[:, :, 6 * A: 7 * A].reshape(n, hh * ww * A)

        # TODO(synk): ProposalCreator (bbox decoding + clipping + NMS) is a
        # data-dependent host-side routine with no clean Pallas equivalent;
        # rois / roi_indices are returned empty.
        rois = np.zeros((0, 4), dtype=np.float32)
        roi_indices = np.zeros((0,), dtype=np.int32)

        return rpn_locs, rpn_scores, rois, roi_indices, anchor, rpn_fg_scores


# ----------------------------------------------------------------------------
# Pure-JAX reference (NCHW convs, mirrors the PyTorch ops and the kernel's
# bf16-operand / f32-accumulate arithmetic) for correctness checking.
# ----------------------------------------------------------------------------
def reference_forward(rpn, x_nchw):
    n, c, hh, ww = x_nchw.shape
    A = rpn.n_anchor
    cdt = rpn.compute_dtype
    dn = ("NCHW", "OIHW", "NCHW")
    h = lax.conv_general_dilated(
        x_nchw.astype(cdt), rpn.w_conv1.astype(cdt), (1, 1), "SAME",
        dimension_numbers=dn, preferred_element_type=jnp.float32,
    ) + rpn.b_conv1[None, :, None, None]
    h = jax.nn.relu(h)
    hc = h.astype(cdt)
    locs = lax.conv_general_dilated(
        hc, rpn.w_loc.astype(cdt), (1, 1), "VALID",
        dimension_numbers=dn, preferred_element_type=jnp.float32,
    ) + rpn.b_loc[None, :, None, None]
    scores = lax.conv_general_dilated(
        hc, rpn.w_score.astype(cdt), (1, 1), "VALID",
        dimension_numbers=dn, preferred_element_type=jnp.float32,
    ) + rpn.b_score[None, :, None, None]
    rpn_locs = jnp.transpose(locs, (0, 2, 3, 1)).reshape(n, -1, 4)
    scores_nhwc = jnp.transpose(scores, (0, 2, 3, 1))
    soft = jax.nn.softmax(scores_nhwc.reshape(n, hh, ww, A, 2), axis=4)
    rpn_fg = soft[..., 1].reshape(n, -1)
    rpn_scores = scores_nhwc.reshape(n, -1, 2)
    return rpn_locs, rpn_scores, rpn_fg


if __name__ == "__main__":
    # Small, module-consistent shapes: batch=2, in_channels=16, spatial=8x8.
    N, C, H, W = 2, 16, 8, 8
    key = jax.random.PRNGKey(0)
    x = jax.random.normal(key, (N, C, H, W), jnp.float32)

    rpn = RegionProposalNetworkPallas(in_channels=C, mid_channels=32, seed=0)
    img_size = (H * rpn.feat_stride, W * rpn.feat_stride)

    rpn_locs, rpn_scores, rois, roi_indices, anchor, rpn_fg = rpn.forward(
        x, img_size, scale=1.0
    )
    jax.block_until_ready((rpn_locs, rpn_scores, rpn_fg))

    # Shape checks (match PyTorch semantics).
    A = rpn.n_anchor
    assert rpn_locs.shape == (N, H * W * A, 4)
    assert rpn_scores.shape == (N, H * W * A, 2)
    assert rpn_fg.shape == (N, H * W * A)
    assert anchor.shape == (H * W * A, 4)

    # Numerical check against a pure-JAX reference with matching bf16 operand
    # quantization (tolerances cover accumulation order, head fusion and the
    # bf16 output slab).
    ref_locs, ref_scores, ref_fg = reference_forward(rpn, x)
    np.testing.assert_allclose(np.asarray(rpn_locs), np.asarray(ref_locs),
                               rtol=1e-2, atol=1e-3)
    np.testing.assert_allclose(np.asarray(rpn_scores), np.asarray(ref_scores),
                               rtol=1e-2, atol=1e-3)
    np.testing.assert_allclose(np.asarray(rpn_fg), np.asarray(ref_fg),
                               rtol=1e-2, atol=2e-3)

    print("KERNEL_OK")
</pallas_src>

<mosaic_0001>
module attributes {stable_mosaic.version = 11 : i64} {
  func.func @rpn_fused_kernel(%arg0: i32, %arg1: i32, %arg2: memref<10x10x16xbf16, #tpu.memory_space<vmem>>, %arg3: memref<144x128xbf16, #tpu.memory_space<vmem>>, %arg4: memref<1x128xf32, #tpu.memory_space<vmem>>, %arg5: memref<128x128xbf16, #tpu.memory_space<vmem>>, %arg6: memref<1x128xf32, #tpu.memory_space<vmem>>, %arg7: memref<64x128xbf16, #tpu.memory_space<vmem>>) attributes {dimension_semantics = [#tpu.dimension_semantics<parallel>, #tpu.dimension_semantics<parallel>], iteration_bounds = array<i64: 2, 1>, scalar_prefetch = 0 : i64, scratch_operands = 0 : i64, tpu.core_type = #tpu.core_type<tc>, window_params = [{transform_indices = @transform_0, window_bounds = array<i64: 10, 10, 16>}, {pipeline_mode = #tpu.pipeline_mode<synchronous>, transform_indices = @transform_1, window_bounds = array<i64: 144, 128>}, {pipeline_mode = #tpu.pipeline_mode<synchronous>, transform_indices = @transform_2, window_bounds = array<i64: 1, 128>}, {pipeline_mode = #tpu.pipeline_mode<synchronous>, transform_indices = @transform_3, window_bounds = array<i64: 128, 128>}, {pipeline_mode = #tpu.pipeline_mode<synchronous>, transform_indices = @transform_4, window_bounds = array<i64: 1, 128>}, {transform_indices = @transform_5, window_bounds = array<i64: 64, 128>}]} {
    %c8_i32 = arith.constant 8 : i32
    %0 = arith.muli %arg1, %c8_i32 : i32
    %c0_i32 = arith.constant 0 : i32
    %1 = arith.addi %0, %c0_i32 : i32
    %2 = arith.index_cast %1 : i32 to index
    %c0 = arith.constant 0 : index
    %c0_0 = arith.constant 0 : index
    %3 = vector.load %arg2[%2, %c0, %c0_0] : memref<10x10x16xbf16, #tpu.memory_space<vmem>>, vector<8x10x16xbf16>
    %4 = arith.extf %3 : vector<8x10x16xbf16> to vector<8x10x16xf32>
    %5 = vector.extract_strided_slice %4 {offsets = [0, 0, 0], sizes = [8, 8, 16], strides = [1, 1, 1]} : vector<8x10x16xf32> to vector<8x8x16xf32>
    %6 = vector.extract_strided_slice %4 {offsets = [0, 1, 0], sizes = [8, 8, 16], strides = [1, 1, 1]} : vector<8x10x16xf32> to vector<8x8x16xf32>
    %7 = vector.extract_strided_slice %4 {offsets = [0, 2, 0], sizes = [8, 8, 16], strides = [1, 1, 1]} : vector<8x10x16xf32> to vector<8x8x16xf32>
    %c1_i32 = arith.constant 1 : i32
    %8 = arith.addi %0, %c1_i32 : i32
    %9 = arith.index_cast %8 : i32 to index
    %c0_1 = arith.constant 0 : index
    %c0_2 = arith.constant 0 : index
    %10 = vector.load %arg2[%9, %c0_1, %c0_2] : memref<10x10x16xbf16, #tpu.memory_space<vmem>>, vector<8x10x16xbf16>
    %11 = arith.extf %10 : vector<8x10x16xbf16> to vector<8x10x16xf32>
    %12 = vector.extract_strided_slice %11 {offsets = [0, 0, 0], sizes = [8, 8, 16], strides = [1, 1, 1]} : vector<8x10x16xf32> to vector<8x8x16xf32>
    %13 = vector.extract_strided_slice %11 {offsets = [0, 1, 0], sizes = [8, 8, 16], strides = [1, 1, 1]} : vector<8x10x16xf32> to vector<8x8x16xf32>
    %14 = vector.extract_strided_slice %11 {offsets = [0, 2, 0], sizes = [8, 8, 16], strides = [1, 1, 1]} : vector<8x10x16xf32> to vector<8x8x16xf32>
    %c2_i32 = arith.constant 2 : i32
    %15 = arith.addi %0, %c2_i32 : i32
    %16 = arith.index_cast %15 : i32 to index
    %c0_3 = arith.constant 0 : index
    %c0_4 = arith.constant 0 : index
    %17 = vector.load %arg2[%16, %c0_3, %c0_4] : memref<10x10x16xbf16, #tpu.memory_space<vmem>>, vector<8x10x16xbf16>
    %18 = arith.extf %17 : vector<8x10x16xbf16> to vector<8x10x16xf32>
    %19 = vector.extract_strided_slice %18 {offsets = [0, 0, 0], sizes = [8, 8, 16], strides = [1, 1, 1]} : vector<8x10x16xf32> to vector<8x8x16xf32>
    %20 = vector.extract_strided_slice %18 {offsets = [0, 1, 0], sizes = [8, 8, 16], strides = [1, 1, 1]} : vector<8x10x16xf32> to vector<8x8x16xf32>
    %21 = vector.extract_strided_slice %18 {offsets = [0, 2, 0], sizes = [8, 8, 16], strides = [1, 1, 1]} : vector<8x10x16xf32> to vector<8x8x16xf32>
    %22 = tpu.concatenate %5, %6, %7, %12, %13, %14, %19, %20, %21 in 2 : vector<8x8x16xf32>, vector<8x8x16xf32>, vector<8x8x16xf32>, vector<8x8x16xf32>, vector<8x8x16xf32>, vector<8x8x16xf32>, vector<8x8x16xf32>, vector<8x8x16xf32>, vector<8x8x16xf32> -> vector<8x8x144xf32>
    %23 = vector.shape_cast %22 : vector<8x8x144xf32> to vector<64x144xf32>
    %24 = arith.truncf %23 : vector<64x144xf32> to vector<64x144xbf16>
    %c0_5 = arith.constant 0 : index
    %c0_6 = arith.constant 0 : index
    %25 = vector.load %arg3[%c0_5, %c0_6] : memref<144x128xbf16, #tpu.memory_space<vmem>>, vector<144x128xbf16>
    %cst = arith.constant dense<0.000000e+00> : vector<64x128xf32>
    %26 = tpu.matmul %24, %25, %cst {dimension_numbers = #tpu.dot_dimension_numbers<[1], [0], [0], [1], [0, 0, 1, 1], [], []>} : vector<64x144xbf16>, vector<144x128xbf16>, vector<64x128xf32> -> vector<64x128xf32>
    %c0_7 = arith.constant 0 : index
    %c0_8 = arith.constant 0 : index
    %27 = vector.load %arg4[%c0_7, %c0_8] : memref<1x128xf32, #tpu.memory_space<vmem>>, vector<1x128xf32>
    %28 = vector.broadcast %27 : vector<1x128xf32> to vector<64x128xf32>
    %29 = arith.addf %26, %28 : vector<64x128xf32>
    %cst_9 = arith.constant 0.000000e+00 : f32
    %30 = vector.broadcast %cst_9 : f32 to vector<64x128xf32>
    %31 = arith.maximumf %29, %30 : vector<64x128xf32>
    %32 = arith.truncf %31 : vector<64x128xf32> to vector<64x128xbf16>
    %c0_10 = arith.constant 0 : index
    %c0_11 = arith.constant 0 : index
    %33 = vector.load %arg5[%c0_10, %c0_11] : memref<128x128xbf16, #tpu.memory_space<vmem>>, vector<128x128xbf16>
    %cst_12 = arith.constant dense<0.000000e+00> : vector<64x128xf32>
    %34 = tpu.matmul %32, %33, %cst_12 {dimension_numbers = #tpu.dot_dimension_numbers<[1], [0], [0], [1], [0, 0, 1, 1], [], []>} : vector<64x128xbf16>, vector<128x128xbf16>, vector<64x128xf32> -> vector<64x128xf32>
    %c0_13 = arith.constant 0 : index
    %c0_14 = arith.constant 0 : index
    %35 = vector.load %arg6[%c0_13, %c0_14] : memref<1x128xf32, #tpu.memory_space<vmem>>, vector<1x128xf32>
    %36 = vector.broadcast %35 : vector<1x128xf32> to vector<64x128xf32>
    %37 = arith.addf %34, %36 : vector<64x128xf32>
    %38 = tpu.iota {dimensions = array<i32: 1>} : vector<1x128xi32>
    %c54_i32 = arith.constant 54 : i32
    %39 = vector.broadcast %c54_i32 : i32 to vector<1x128xi32>
    %40 = arith.cmpi sge, %38, %39 : vector<1x128xi32>
    %c63_i32 = arith.constant 63 : i32
    %41 = vector.broadcast %c63_i32 : i32 to vector<1x128xi32>
    %42 = arith.cmpi slt, %38, %41 : vector<1x128xi32>
    %43 = arith.andi %40, %42 : vector<1x128xi1>
    %44 = arith.negf %37 : vector<64x128xf32>
    %45 = math.exp %44 : vector<64x128xf32>
    %cst_15 = arith.constant 1.000000e+00 : f32
    %46 = vector.broadcast %cst_15 : f32 to vector<64x128xf32>
    %47 = arith.addf %46, %45 : vector<64x128xf32>
    %48 = arith.divf %46, %47 : vector<64x128xf32>
    %49 = vector.shape_cast %43 : vector<1x128xi1> to vector<1x128xi1>
    %50 = vector.broadcast %49 : vector<1x128xi1> to vector<64x128xi1>
    %51 = arith.select %50, %48, %37 : vector<64x128xi1>, vector<64x128xf32>
    %52 = arith.truncf %51 : vector<64x128xf32> to vector<64x128xbf16>
    %c0_16 = arith.constant 0 : index
    %c0_17 = arith.constant 0 : index
    %53 = vector.load %arg7[%c0_16, %c0_17] : memref<64x128xbf16, #tpu.memory_space<vmem>>, vector<64x128xbf16>
    tpu.vector_store %arg7[%c0_16, %c0_17], %52 {strides = array<i32>} : memref<64x128xbf16, #tpu.memory_space<vmem>>, vector<64x128xbf16>,
    return
  }
  func.func @transform_0(%arg0: i32, %arg1: i32) -> (i32, i32, i32) {
    %c0_i32 = arith.constant 0 : i32
    %c0_i32_0 = arith.constant 0 : i32
    %c0_i32_1 = arith.constant 0 : i32
    return %arg0, %c0_i32, %c0_i32_0 : i32, i32, i32
  }
  func.func @transform_1(%arg0: i32, %arg1: i32) -> (i32, i32) {
    %c0_i32 = arith.constant 0 : i32
    %c0_i32_0 = arith.constant 0 : i32
    %c0_i32_1 = arith.constant 0 : i32
    return %c0_i32, %c0_i32_0 : i32, i32
  }
  func.func @transform_2(%arg0: i32, %arg1: i32) -> (i32, i32) {
    %c0_i32 = arith.constant 0 : i32
    %c0_i32_0 = arith.constant 0 : i32
    %c0_i32_1 = arith.constant 0 : i32
    return %c0_i32, %c0_i32_0 : i32, i32
  }
  func.func @transform_3(%arg0: i32, %arg1: i32) -> (i32, i32) {
    %c0_i32 = arith.constant 0 : i32
    %c0_i32_0 = arith.constant 0 : i32
    %c0_i32_1 = arith.constant 0 : i32
    return %c0_i32, %c0_i32_0 : i32, i32
  }
  func.func @transform_4(%arg0: i32, %arg1: i32) -> (i32, i32) {
    %c0_i32 = arith.constant 0 : i32
    %c0_i32_0 = arith.constant 0 : i32
    %c0_i32_1 = arith.constant 0 : i32
    return %c0_i32, %c0_i32_0 : i32, i32
  }
  func.func @transform_5(%arg0: i32, %arg1: i32) -> (i32, i32) {
    %c1_i32 = arith.constant 1 : i32
    %0 = arith.muli %arg0, %c1_i32 : i32
    %1 = arith.addi %0, %arg1 : i32
    %c0_i32 = arith.constant 0 : i32
    %c0_i32_0 = arith.constant 0 : i32
    return %1, %c0_i32 : i32, i32
  }
}

</mosaic_0001>

<llo_original>
// kernel: tpu_custom_call.1
$region0: #{tpu_custom_call.1}
  #allocation0 [shape = 'u32[]', space=smem, size = 0x4, offset = 0x4, fixed_abs, tag = 'smem constant byte address 0x4 - core index']
  #allocation1 [shape = 'u32[144,128]{1,0:T(1,128)}', space=vmem, size = 0x12000, scoped, tag = 'internal scratch']
  %s0 = inlined_call_operand.vmem [shape: bf16[20,10,16], index: 0, kind: input, shape index: {}]
  %s1 = inlined_call_operand.vmem [shape: bf16[144,128], index: 1, kind: input, shape index: {}]
  %s2 = inlined_call_operand.vmem [shape: f32[1,128], index: 2, kind: input, shape index: {}]
  %s3 = inlined_call_operand.vmem [shape: bf16[128,128], index: 3, kind: input, shape index: {}]
  %s4 = inlined_call_operand.vmem [shape: f32[1,128], index: 4, kind: input, shape index: {}]
  %s5 = inlined_call_operand.hbm [shape: bf16[128,128], index: 5, kind: output, shape index: {}]
  %s6 = sld [smem:[#allocation0]]
  $region53: #{tpu_custom_call.1} parent=0
    _
  %s8 = ssub.s32 1, %s6
  %s9 = scalar_select 0, %s8, %s6
  $region1: #{tpu_custom_call.1} parent=0
    #allocation2 [shape = 'u8[32768]{0}', space=vmem, size = 0x8000, scoped, tag = 'output window, operand 0']
    #allocation3 [shape = 's32[2]{0}', space=sflag, size = 0x8, scoped, tag = 'scoped memory for tpu_custom_call.1']
    %10 = vsyncpa [#allocation3], 0
    %s11 = scalar_lea.sflag [#allocation3], 1
    %12 = vsyncpa %s11, 0
    loop: start=0, step=1, limit=4
    $region2: #{tpu_custom_call.1} parent=1 // loop_pre_header
      _
    $region3: #{tpu_custom_call.1} parent=1 // loop_header
      %s14 = sphi 0, %s18
      %p15 = scmp.ge.s32.totalorder %s14, 4
      %s21 = sphi 0, %s33
      %s22 = sphi 0, %s29
      %s23 = sphi 0, %s21
      %s24 = sphi 0, %s22
      %s25 = sphi 0, %s23
      %s26 = sphi 0, %s24
      %s36 = sphi 0, %s38
      %s39 = sphi 0, %s36
      %s40 = sphi 0, %s39
      %s56 = sphi 0, %s40
      %s60 = sphi 0, %s60
      %s62 = sphi 0, %s60
      %s63 = sphi 0, %s62
      %s77 = sphi 0, %s63
      %s81 = sphi 0, %s81
      %s83 = sphi 0, %s81
      %s84 = sphi 0, %s83
      %s98 = sphi 0, %s84
      %s102 = sphi 0, %s102
      %s104 = sphi 0, %s102
      %s105 = sphi 0, %s104
      %s119 = sphi 0, %s105
      %s123 = sphi 0, %s123
      %s125 = sphi 0, %s123
      %s126 = sphi 0, %s125
      %s140 = sphi 0, %s126
      %s148 = sphi 0, %s150
      %s151 = sphi 0, %s148
      %s152 = sphi 0, %s151
      %s168 = sphi 0, %s152
    $region4: #{tpu_custom_call.1} parent=1 // loop_header_branch
      %17 = sbr.rel (%p15) target = $region8
    $region5: #{tpu_custom_call.1} parent=1 // loop_body
      %s19 = ssub.s32 %s14, 1
      %s20 = ssub.s32 %s14, 2
      %s27 = sadd.s32 1, %s22
      %p28 = scmp.ge.s32.totalorder %s27, 1
      %s29 = scalar_select %p28, 0, %s27
      %s30 = sadd.s32 1, %s21
      %s31 = scalar_select %p28, %s30, %s21
      %p32 = scmp.ge.s32.totalorder %s31, 2
      %s33 = scalar_select %p32, 0, %s31
      %s34 = ssub.s32 %s21, %s33
      %p35 = scmp.eq.s32.totalorder %s34, 0
      %s37 = sadd.s32 %s36, 1
      %s38 = scalar_select %p35, %s36, %s37
      %p41 = pneg %p35
      %p42 = scmp.eq.s32.totalorder %s14, 1
      %p43 = por %p41, %p42
      %p44 = scmp.ne.s32.totalorder %s36, %s39
      %p45 = scmp.eq.s32.totalorder %s14, 0
      %p46 = por %p44, %p45
      %p47 = scmp.ne.s32.totalorder %s36, %s39
      %p48 = scmp.eq.s32.totalorder %s19, 1
      %p49 = por %p47, %p48
      %p50 = scmp.ne.s32.totalorder %s39, %s40
      %p51 = scmp.eq.s32.totalorder %s19, 0
      %p52 = por %p50, %p51
      %p53 = scmp.ne.s32.totalorder %s39, %s40
      %p54 = scmp.eq.s32.totalorder %s20, 1
      %p55 = por %p53, %p54
      %p57 = scmp.ne.s32.totalorder %s40, %s56
      %p58 = scmp.eq.s32.totalorder %s20, 0
      %p59 = por %p57, %p58
      %s61 = sadd.s32 %s60, 1
      %p64 = scmp.eq.s32.totalorder %s14, 1
      %p65 = scmp.ne.s32.totalorder %s60, %s62
      %p66 = scmp.eq.s32.totalorder %s14, 0
      %p67 = por %p65, %p66
      %p68 = scmp.ne.s32.totalorder %s60, %s62
      %p69 = scmp.eq.s32.totalorder %s19, 1
      %p70 = por %p68, %p69
      %p71 = scmp.ne.s32.totalorder %s62, %s63
      %p72 = scmp.eq.s32.totalorder %s19, 0
      %p73 = por %p71, %p72
      %p74 = scmp.ne.s32.totalorder %s62, %s63
      %p75 = scmp.eq.s32.totalorder %s20, 1
      %p76 = por %p74, %p75
      %p78 = scmp.ne.s32.totalorder %s63, %s77
      %p79 = scmp.eq.s32.totalorder %s20, 0
      %p80 = por %p78, %p79
      %s82 = sadd.s32 %s81, 1
      %p85 = scmp.eq.s32.totalorder %s14, 1
      %p86 = scmp.ne.s32.totalorder %s81, %s83
      %p87 = scmp.eq.s32.totalorder %s14, 0
      %p88 = por %p86, %p87
      %p89 = scmp.ne.s32.totalorder %s81, %s83
      %p90 = scmp.eq.s32.totalorder %s19, 1
      %p91 = por %p89, %p90
      %p92 = scmp.ne.s32.totalorder %s83, %s84
      %p93 = scmp.eq.s32.totalorder %s19, 0
      %p94 = por %p92, %p93
      %p95 = scmp.ne.s32.totalorder %s83, %s84
      %p96 = scmp.eq.s32.totalorder %s20, 1
      %p97 = por %p95, %p96
      %p99 = scmp.ne.s32.totalorder %s84, %s98
      %p100 = scmp.eq.s32.totalorder %s20, 0
      %p101 = por %p99, %p100
      %s103 = sadd.s32 %s102, 1
      %p106 = scmp.eq.s32.totalorder %s14, 1
      %p107 = scmp.ne.s32.totalorder %s102, %s104
      %p108 = scmp.eq.s32.totalorder %s14, 0
      %p109 = por %p107, %p108
      %p110 = scmp.ne.s32.totalorder %s102, %s104
      %p111 = scmp.eq.s32.totalorder %s19, 1
      %p112 = por %p110, %p111
      %p113 = scmp.ne.s32.totalorder %s104, %s105
      %p114 = scmp.eq.s32.totalorder %s19, 0
      %p115 = por %p113, %p114
      %p116 = scmp.ne.s32.totalorder %s104, %s105
      %p117 = scmp.eq.s32.totalorder %s20, 1
      %p118 = por %p116, %p117
      %p120 = scmp.ne.s32.totalorder %s105, %s119
      %p121 = scmp.eq.s32.totalorder %s20, 0
      %p122 = por %p120, %p121
      %s124 = sadd.s32 %s123, 1
      %p127 = scmp.eq.s32.totalorder %s14, 1
      %p128 = scmp.ne.s32.totalorder %s123, %s125
      %p129 = scmp.eq.s32.totalorder %s14, 0
      %p130 = por %p128, %p129
      %p131 = scmp.ne.s32.totalorder %s123, %s125
      %p132 = scmp.eq.s32.totalorder %s19, 1
      %p133 = por %p131, %p132
      %p134 = scmp.ne.s32.totalorder %s125, %s126
      %p135 = scmp.eq.s32.totalorder %s19, 0
      %p136 = por %p134, %p135
      %p137 = scmp.ne.s32.totalorder %s125, %s126
      %p138 = scmp.eq.s32.totalorder %s20, 1
      %p139 = por %p137, %p138
      %p141 = scmp.ne.s32.totalorder %s126, %s140
      %p142 = scmp.eq.s32.totalorder %s20, 0
      %p143 = por %p141, %p142
      %s144 = sadd.s32 %s21, %s22
      %s145 = sadd.s32 %s33, %s29
      %s146 = ssub.s32 %s144, %s145
      %p147 = scmp.eq.s32.totalorder %s146, 0
      %s149 = sadd.s32 %s148, 1
      %s150 = scalar_select %p147, %s148, %s149
      %p153 = pneg %p147
      %p154 = scmp.eq.s32.totalorder %s14, 1
      %p155 = por %p153, %p154
      %p156 = scmp.ne.s32.totalorder %s148, %s151
      %p157 = scmp.eq.s32.totalorder %s14, 0
      %p158 = por %p156, %p157
      %p159 = scmp.ne.s32.totalorder %s148, %s151
      %p160 = scmp.eq.s32.totalorder %s19, 1
      %p161 = por %p159, %p160
      %p162 = scmp.ne.s32.totalorder %s151, %s152
      %p163 = scmp.eq.s32.totalorder %s19, 0
      %p164 = por %p162, %p163
      %p165 = scmp.ne.s32.totalorder %s151, %s152
      %p166 = scmp.eq.s32.totalorder %s20, 1
      %p167 = por %p165, %p166
      %p169 = scmp.ne.s32.totalorder %s152, %s168
      %p170 = scmp.eq.s32.totalorder %s20, 0
      %p171 = por %p169, %p170
      %p172 = scmp.le.s32.totalorder 1, %s14
      %p173 = scmp.lt.s32.totalorder %s14, 3
      %p174 = pnand %p172, %p173
      %p175 = pneg %p174
      // Predicated region
      $region9: #{tpu_custom_call.1} parent=5 // pred_check
        _
      $region10: #{tpu_custom_call.1} parent=5 // pred_check_branch
        %177 = sbr.rel (%p174) target = $region12
      $region11: #{tpu_custom_call.1} parent=5 // pred_region
        %s178 = ssub.s32 %s14, 1
        // Predicated region
        $region13: #{tpu_custom_call.1} parent=11 // pred_check
          %p179 = pneg %p73
        $region14: #{tpu_custom_call.1} parent=11 // pred_check_branch
          %181 = sbr.rel (%p179) target = $region16
        $region15: #{tpu_custom_call.1} parent=11 // pred_region
          _
        $region16: #{tpu_custom_call.1} parent=11 // pred_fallthru
          _
        // Predicated region
        $region17: #{tpu_custom_call.1} parent=11 // pred_check
          %p182 = pneg %p94
        $region18: #{tpu_custom_call.1} parent=11 // pred_check_branch
          %184 = sbr.rel (%p182) target = $region20
        $region19: #{tpu_custom_call.1} parent=11 // pred_region
          _
        $region20: #{tpu_custom_call.1} parent=11 // pred_fallthru
          _
        // Predicated region
        $region21: #{tpu_custom_call.1} parent=11 // pred_check
          %p185 = pneg %p115
        $region22: #{tpu_custom_call.1} parent=11 // pred_check_branch
          %187 = sbr.rel (%p185) target = $region24
        $region23: #{tpu_custom_call.1} parent=11 // pred_region
          _
        $region24: #{tpu_custom_call.1} parent=11 // pred_fallthru
          _
        // Predicated region
        $region25: #{tpu_custom_call.1} parent=11 // pred_check
          %p188 = pneg %p136
        $region26: #{tpu_custom_call.1} parent=11 // pred_check_branch
          %190 = sbr.rel (%p188) target = $region28
        $region27: #{tpu_custom_call.1} parent=11 // pred_region
          _
        $region28: #{tpu_custom_call.1} parent=11 // pred_fallthru
          _
      $region12: #{tpu_custom_call.1} parent=5 // pred_fallthru
        _
      %p191 = scmp.lt.s32.totalorder %s14, 2
      // Predicated region
      $region29: #{tpu_custom_call.1} parent=5 // pred_check
        %p192 = pneg %p191
      $region30: #{tpu_custom_call.1} parent=5 // pred_check_branch
        %194 = sbr.rel (%p192) target = $region32
      $region31: #{tpu_custom_call.1} parent=5 // pred_region
        // Predicated region
        $region33: #{tpu_custom_call.1} parent=31 // pred_check
          %p195 = pneg %p46
        $region34: #{tpu_custom_call.1} parent=31 // pred_check_branch
          %197 = sbr.rel (%p195) target = $region36
        $region35: #{tpu_custom_call.1} parent=31 // pred_region
          %s198 = smul.u32 10, %s21
          %p199 = scmp.lt.s32.totalorder %s198, 19
          %s200 = scalar_select %p199, %s198, 19
          %s201 = smul.addr %s200, 2
          %s202 = smul.addr %s201, 4
          %s203 = scalar_lea.vmem %s0, %s202
          %s204 = smul.u32 10, %s21
        $region36: #{tpu_custom_call.1} parent=31 // pred_fallthru
          _
      $region32: #{tpu_custom_call.1} parent=5 // pred_fallthru
        _
      %p205 = scmp.le.s32.totalorder 1, %s14
      %p206 = scmp.lt.s32.totalorder %s14, 3
      %p207 = pnand %p205, %p206
      %p208 = pneg %p207
      // Predicated region
      $region37: #{tpu_custom_call.1} parent=5 // pred_check
        _
      $region38: #{tpu_custom_call.1} parent=5 // pred_check_branch
        %210 = sbr.rel (%p207) target = $region40
      $region39: #{tpu_custom_call.1} parent=5 // pred_region
        %s211 = ssub.s32 %s14, 1
        %s212 = smul.u32 10, %s23
        %p213 = scmp.lt.s32.totalorder %s212, 19
        %s214 = scalar_select %p213, %s212, 19
        %s215 = smul.addr %s214, 2
        %s216 = smul.addr %s215, 4
        %s217 = scalar_lea.vmem %s0, %s216
        %p218 = pneg %p52
        %p219 = pneg %p49
        %p220 = pneg %p73
        %p221 = pneg %p70
        %p222 = pneg %p94
        %p223 = pneg %p91
        %p224 = pneg %p115
        %p225 = pneg %p112
        %p226 = pneg %p136
        %p227 = pneg %p133
        %p228 = pneg %p164
        %p229 = pneg %p161
        %s230 = sand.u32 %s151, 1
        %s231 = scalar_lea.sflag [#allocation3], %s230
        %s232 = sand.u32 %s151, 1
        %s233 = smul.addr %s232, 32
        %s234 = scalar_lea.vmem [#allocation2], %s233
        %s235 = smul.u32 10, %s23
        %p236 = scmp.lt.s32.totalorder %s235, 19
        %s237 = scalar_select %p236, %s235, 19
        %s238 = smul.addr %s237, 2
        %s239 = smul.addr %s238, 4
        %s240 = scalar_lea.vmem %s0, %s239
        %s241 = smul.u32 10, %s23
        %s242 = sadd.s32 %s23, %s24
        %s243 = smul.u32 8, %s242
        %s245 = smul.u32 %s24, 8
        %s246 = smul.u32 %s245, 2
        %s247 = smul.addr %s246, 4
        %s248 = scalar_lea.vmem %s240, %s247
        %v249 = vld [vmem:[%s248] sm:$0xf]
        %v250 = vld [vmem:[%s248 + $0x4] sm:$0x1]
        %v251 = vld [vmem:[%s248 + $0x8] sm:$0xf]
        %v252 = vld [vmem:[%s248 + $0xc] sm:$0x1]
        %v253 = vld [vmem:[%s248 + $0x10] sm:$0xf]
        %v254 = vld [vmem:[%s248 + $0x14] sm:$0x1]
        %v255 = vld [vmem:[%s248 + $0x18] sm:$0xf]
        %v256 = vld [vmem:[%s248 + $0x1c] sm:$0x1]
        %v257 = vld [vmem:[%s248 + $0x20] sm:$0xf]
        %v258 = vld [vmem:[%s248 + $0x24] sm:$0x1]
        %v259 = vld [vmem:[%s248 + $0x28] sm:$0xf]
        %v260 = vld [vmem:[%s248 + $0x2c] sm:$0x1]
        %v261 = vld [vmem:[%s248 + $0x30] sm:$0xf]
        %v262 = vld [vmem:[%s248 + $0x34] sm:$0x1]
        %v263 = vld [vmem:[%s248 + $0x38] sm:$0xf]
        %v264 = vld [vmem:[%s248 + $0x3c] sm:$0x1]
        %v265 = vunpack.c.l.bf16 %v249
        %v266 = vunpack.c.l.bf16 %v250
        %v267 = vunpack.c.l.bf16 %v251
        %v268 = vunpack.c.l.bf16 %v252
        %v269 = vunpack.c.l.bf16 %v253
        %v270 = vunpack.c.l.bf16 %v254
        %v271 = vunpack.c.l.bf16 %v255
        %v272 = vunpack.c.l.bf16 %v256
        %v273 = vunpack.c.l.bf16 %v257
        %v274 = vunpack.c.l.bf16 %v258
        %v275 = vunpack.c.l.bf16 %v259
        %v276 = vunpack.c.l.bf16 %v260
        %v277 = vunpack.c.l.bf16 %v261
        %v278 = vunpack.c.l.bf16 %v262
        %v279 = vunpack.c.l.bf16 %v263
        %v280 = vunpack.c.l.bf16 %v264
        %s281 = sadd.s32 %s245, 1
        %s282 = smul.u32 %s281, 2
        %s283 = smul.addr %s282, 4
        %s284 = scalar_lea.vmem %s240, %s283
        %v285 = vld [vmem:[%s284] sm:$0xf]
        %v286 = vld [vmem:[%s284 + $0x4] sm:$0x1]
        %v287 = vld [vmem:[%s284 + $0x8] sm:$0xf]
        %v288 = vld [vmem:[%s284 + $0xc] sm:$0x1]
        %v289 = vld [vmem:[%s284 + $0x10] sm:$0xf]
        %v290 = vld [vmem:[%s284 + $0x14] sm:$0x1]
        %v291 = vld [vmem:[%s284 + $0x18] sm:$0xf]
        %v292 = vld [vmem:[%s284 + $0x1c] sm:$0x1]
        %v293 = vld [vmem:[%s284 + $0x20] sm:$0xf]
        %v294 = vld [vmem:[%s284 + $0x24] sm:$0x1]
        %v295 = vld [vmem:[%s284 + $0x28] sm:$0xf]
        %v296 = vld [vmem:[%s284 + $0x2c] sm:$0x1]
        %v297 = vld [vmem:[%s284 + $0x30] sm:$0xf]
        %v298 = vld [vmem:[%s284 + $0x34] sm:$0x1]
        %v299 = vld [vmem:[%s284 + $0x38] sm:$0xf]
        %v300 = vld [vmem:[%s284 + $0x3c] sm:$0x1]
        %v301 = vunpack.c.l.bf16 %v285
        %v302 = vunpack.c.l.bf16 %v286
        %v303 = vunpack.c.l.bf16 %v287
        %v304 = vunpack.c.l.bf16 %v288
        %v305 = vunpack.c.l.bf16 %v289
        %v306 = vunpack.c.l.bf16 %v290
        %v307 = vunpack.c.l.bf16 %v291
        %v308 = vunpack.c.l.bf16 %v292
        %v309 = vunpack.c.l.bf16 %v293
        %v310 = vunpack.c.l.bf16 %v294
        %v311 = vunpack.c.l.bf16 %v295
        %v312 = vunpack.c.l.bf16 %v296
        %v313 = vunpack.c.l.bf16 %v297
        %v314 = vunpack.c.l.bf16 %v298
        %v315 = vunpack.c.l.bf16 %v299
        %v316 = vunpack.c.l.bf16 %v300
        %s317 = sadd.s32 %s245, 2
        %s318 = smul.u32 %s317, 2
        %s319 = smul.addr %s318, 4
        %s320 = scalar_lea.vmem %s240, %s319
        %v321 = vld [vmem:[%s320] sm:$0xf]
        %v322 = vld [vmem:[%s320 + $0x4] sm:$0x1]
        %v323 = vld [vmem:[%s320 + $0x8] sm:$0xf]
        %v324 = vld [vmem:[%s320 + $0xc] sm:$0x1]
        %v325 = vld [vmem:[%s320 + $0x10] sm:$0xf]
        %v326 = vld [vmem:[%s320 + $0x14] sm:$0x1]
        %v327 = vld [vmem:[%s320 + $0x18] sm:$0xf]
        %v328 = vld [vmem:[%s320 + $0x1c] sm:$0x1]
        %v329 = vld [vmem:[%s320 + $0x20] sm:$0xf]
        %v330 = vld [vmem:[%s320 + $0x24] sm:$0x1]
        %v331 = vld [vmem:[%s320 + $0x28] sm:$0xf]
        %v332 = vld [vmem:[%s320 + $0x2c] sm:$0x1]
        %v333 = vld [vmem:[%s320 + $0x30] sm:$0xf]
        %v334 = vld [vmem:[%s320 + $0x34] sm:$0x1]
        %v335 = vld [vmem:[%s320 + $0x38] sm:$0xf]
        %v336 = vld [vmem:[%s320 + $0x3c] sm:$0x1]
        %v337 = vunpack.c.l.bf16 %v321
        %v338 = vunpack.c.l.bf16 %v322
        %v339 = vunpack.c.l.bf16 %v323
        %v340 = vunpack.c.l.bf16 %v324
        %v341 = vunpack.c.l.bf16 %v325
        %v342 = vunpack.c.l.bf16 %v326
        %v343 = vunpack.c.l.bf16 %v327
        %v344 = vunpack.c.l.bf16 %v328
        %v345 = vunpack.c.l.bf16 %v329
        %v346 = vunpack.c.l.bf16 %v330
        %v347 = vunpack.c.l.bf16 %v331
        %v348 = vunpack.c.l.bf16 %v332
        %v349 = vunpack.c.l.bf16 %v333
        %v350 = vunpack.c.l.bf16 %v334
        %v351 = vunpack.c.l.bf16 %v335
        %v352 = vunpack.c.l.bf16 %v336
        %vm369 = vcmask 1046528
        %v370 = vrot.slane %v265, 1
        %v371 = vrot.slane %v266, 1
        %v372 = vsel %vm369, %v370, %v371
        %v373 = vrot.slane %v267, 1
        %v374 = vrot.slane %v268, 1
        %v375 = vsel %vm369, %v373, %v374
        %v376 = vrot.slane %v269, 1
        %v377 = vrot.slane %v270, 1
        %v378 = vsel %vm369, %v376, %v377
        %v379 = vrot.slane %v271, 1
        %v380 = vrot.slane %v272, 1
        %v381 = vsel %vm369, %v379, %v380
        %v382 = vrot.slane %v273, 1
        %v383 = vrot.slane %v274, 1
        %v384 = vsel %vm369, %v382, %v383
        %v385 = vrot.slane %v275, 1
        %v386 = vrot.slane %v276, 1
        %v387 = vsel %vm369, %v385, %v386
        %v388 = vrot.slane %v277, 1
        %v389 = vrot.slane %v278, 1
        %v390 = vsel %vm369, %v388, %v389
        %v391 = vrot.slane %v279, 1
        %v392 = vrot.slane %v280, 1
        %v393 = vsel %vm369, %v391, %v392
        %394 = vrot.lane.b32.xlu0 %v372, 16
        %v395 = vpop.permute.xlu0 %394
        %396 = vrot.lane.b32.xlu0 %v375, 16
        %v397 = vpop.permute.xlu0 %396
        %398 = vrot.lane.b32.xlu0 %v378, 16
        %v399 = vpop.permute.xlu0 %398
        %400 = vrot.lane.b32.xlu0 %v381, 16
        %v401 = vpop.permute.xlu0 %400
        %402 = vrot.lane.b32.xlu0 %v384, 16
        %v403 = vpop.permute.xlu0 %402
        %404 = vrot.lane.b32.xlu0 %v387, 16
        %v405 = vpop.permute.xlu0 %404
        %406 = vrot.lane.b32.xlu0 %v390, 16
        %v407 = vpop.permute.xlu0 %406
        %408 = vrot.lane.b32.xlu0 %v393, 16
        %v409 = vpop.permute.xlu0 %408
        %vm418 = vcmask 1045504
        %v419 = vrot.slane %v265, 2
        %v420 = vrot.slane %v266, 2
        %v421 = vsel %vm418, %v419, %v420
        %v422 = vrot.slane %v267, 2
        %v423 = vrot.slane %v268, 2
        %v424 = vsel %vm418, %v422, %v423
        %v425 = vrot.slane %v269, 2
        %v426 = vrot.slane %v270, 2
        %v427 = vsel %vm418, %v425, %v426
        %v428 = vrot.slane %v271, 2
        %v429 = vrot.slane %v272, 2
        %v430 = vsel %vm418, %v428, %v429
        %v431 = vrot.slane %v273, 2
        %v432 = vrot.slane %v274, 2
        %v433 = vsel %vm418, %v431, %v432
        %v434 = vrot.slane %v275, 2
        %v435 = vrot.slane %v276, 2
        %v436 = vsel %vm418, %v434, %v435
        %v437 = vrot.slane %v277, 2
        %v438 = vrot.slane %v278, 2
        %v439 = vsel %vm418, %v437, %v438
        %v440 = vrot.slane %v279, 2
        %v441 = vrot.slane %v280, 2
        %v442 = vsel %vm418, %v440, %v441
        %443 = vrot.lane.b32.xlu0 %v421, 32
        %v444 = vpop.permute.xlu0 %443
        %445 = vrot.lane.b32.xlu0 %v424, 32
        %v446 = vpop.permute.xlu0 %445
        %447 = vrot.lane.b32.xlu0 %v427, 32
        %v448 = vpop.permute.xlu0 %447
        %449 = vrot.lane.b32.xlu0 %v430, 32
        %v450 = vpop.permute.xlu0 %449
        %451 = vrot.lane.b32.xlu0 %v433, 32
        %v452 = vpop.permute.xlu0 %451
        %453 = vrot.lane.b32.xlu0 %v436, 32
        %v454 = vpop.permute.xlu0 %453
        %455 = vrot.lane.b32.xlu0 %v439, 32
        %v456 = vpop.permute.xlu0 %455
        %457 = vrot.lane.b32.xlu0 %v442, 32
        %v458 = vpop.permute.xlu0 %457
        %475 = vrot.lane.b32.xlu0 %v301, 48
        %v476 = vpop.permute.xlu0 %475
        %477 = vrot.lane.b32.xlu0 %v303, 48
        %v478 = vpop.permute.xlu0 %477
        %479 = vrot.lane.b32.xlu0 %v305, 48
        %v480 = vpop.permute.xlu0 %479
        %481 = vrot.lane.b32.xlu0 %v307, 48
        %v482 = vpop.permute.xlu0 %481
        %483 = vrot.lane.b32.xlu0 %v309, 48
        %v484 = vpop.permute.xlu0 %483
        %485 = vrot.lane.b32.xlu0 %v311, 48
        %v486 = vpop.permute.xlu0 %485
        %487 = vrot.lane.b32.xlu0 %v313, 48
        %v488 = vpop.permute.xlu0 %487
        %489 = vrot.lane.b32.xlu0 %v315, 48
        %v490 = vpop.permute.xlu0 %489
        %v507 = vrot.slane %v301, 1
        %v508 = vrot.slane %v302, 1
        %v509 = vsel %vm369, %v507, %v508
        %v510 = vrot.slane %v303, 1
        %v511 = vrot.slane %v304, 1
        %v512 = vsel %vm369, %v510, %v511
        %v513 = vrot.slane %v305, 1
        %v514 = vrot.slane %v306, 1
        %v515 = vsel %vm369, %v513, %v514
        %v516 = vrot.slane %v307, 1
        %v517 = vrot.slane %v308, 1
        %v518 = vsel %vm369, %v516, %v517
        %v519 = vrot.slane %v309, 1
        %v520 = vrot.slane %v310, 1
        %v521 = vsel %vm369, %v519, %v520
        %v522 = vrot.slane %v311, 1
        %v523 = vrot.slane %v312, 1
        %v524 = vsel %vm369, %v522, %v523
        %v525 = vrot.slane %v313, 1
        %v526 = vrot.slane %v314, 1
        %v527 = vsel %vm369, %v525, %v526
        %v528 = vrot.slane %v315, 1
        %v529 = vrot.slane %v316, 1
        %v530 = vsel %vm369, %v528, %v529
        %531 = vrot.lane.b32.xlu0 %v509, 64
        %v532 = vpop.permute.xlu0 %531
        %533 = vrot.lane.b32.xlu0 %v512, 64
        %v534 = vpop.permute.xlu0 %533
        %535 = vrot.lane.b32.xlu0 %v515, 64
        %v536 = vpop.permute.xlu0 %535
        %537 = vrot.lane.b32.xlu0 %v518, 64
        %v538 = vpop.permute.xlu0 %537
        %539 = vrot.lane.b32.xlu0 %v521, 64
        %v540 = vpop.permute.xlu0 %539
        %541 = vrot.lane.b32.xlu0 %v524, 64
        %v542 = vpop.permute.xlu0 %541
        %543 = vrot.lane.b32.xlu0 %v527, 64
        %v544 = vpop.permute.xlu0 %543
        %545 = vrot.lane.b32.xlu0 %v530, 64
        %v546 = vpop.permute.xlu0 %545
        %v555 = vrot.slane %v301, 2
        %v556 = vrot.slane %v302, 2
        %v557 = vsel %vm418, %v555, %v556
        %v558 = vrot.slane %v303, 2
        %v559 = vrot.slane %v304, 2
        %v560 = vsel %vm418, %v558, %v559
        %v561 = vrot.slane %v305, 2
        %v562 = vrot.slane %v306, 2
        %v563 = vsel %vm418, %v561, %v562
        %v564 = vrot.slane %v307, 2
        %v565 = vrot.slane %v308, 2
        %v566 = vsel %vm418, %v564, %v565
        %v567 = vrot.slane %v309, 2
        %v568 = vrot.slane %v310, 2
        %v569 = vsel %vm418, %v567, %v568
        %v570 = vrot.slane %v311, 2
        %v571 = vrot.slane %v312, 2
        %v572 = vsel %vm418, %v570, %v571
        %v573 = vrot.slane %v313, 2
        %v574 = vrot.slane %v314, 2
        %v575 = vsel %vm418, %v573, %v574
        %v576 = vrot.slane %v315, 2
        %v577 = vrot.slane %v316, 2
        %v578 = vsel %vm418, %v576, %v577
        %579 = vrot.lane.b32.xlu0 %v557, 80
        %v580 = vpop.permute.xlu0 %579
        %581 = vrot.lane.b32.xlu0 %v560, 80
        %v582 = vpop.permute.xlu0 %581
        %583 = vrot.lane.b32.xlu0 %v563, 80
        %v584 = vpop.permute.xlu0 %583
        %585 = vrot.lane.b32.xlu0 %v566, 80
        %v586 = vpop.permute.xlu0 %585
        %587 = vrot.lane.b32.xlu0 %v569, 80
        %v588 = vpop.permute.xlu0 %587
        %589 = vrot.lane.b32.xlu0 %v572, 80
        %v590 = vpop.permute.xlu0 %589
        %591 = vrot.lane.b32.xlu0 %v575, 80
        %v592 = vpop.permute.xlu0 %591
        %593 = vrot.lane.b32.xlu0 %v578, 80
        %v594 = vpop.permute.xlu0 %593
        %611 = vrot.lane.b32.xlu0 %v337, 96
        %v612 = vpop.permute.xlu0 %611
        %613 = vrot.lane.b32.xlu0 %v339, 96
        %v614 = vpop.permute.xlu0 %613
        %615 = vrot.lane.b32.xlu0 %v341, 96
        %v616 = vpop.permute.xlu0 %615
        %617 = vrot.lane.b32.xlu0 %v343, 96
        %v618 = vpop.permute.xlu0 %617
        %619 = vrot.lane.b32.xlu0 %v345, 96
        %v620 = vpop.permute.xlu0 %619
        %621 = vrot.lane.b32.xlu0 %v347, 96
        %v622 = vpop.permute.xlu0 %621
        %623 = vrot.lane.b32.xlu0 %v349, 96
        %v624 = vpop.permute.xlu0 %623
        %625 = vrot.lane.b32.xlu0 %v351, 96
        %v626 = vpop.permute.xlu0 %625
        %v643 = vrot.slane %v337, 1
        %v644 = vrot.slane %v338, 1
        %v645 = vsel %vm369, %v643, %v644
        %v646 = vrot.slane %v339, 1
        %v647 = vrot.slane %v340, 1
        %v648 = vsel %vm369, %v646, %v647
        %v649 = vrot.slane %v341, 1
        %v650 = vrot.slane %v342, 1
        %v651 = vsel %vm369, %v649, %v650
        %v652 = vrot.slane %v343, 1
        %v653 = vrot.slane %v344, 1
        %v654 = vsel %vm369, %v652, %v653
        %v655 = vrot.slane %v345, 1
        %v656 = vrot.slane %v346, 1
        %v657 = vsel %vm369, %v655, %v656
        %v658 = vrot.slane %v347, 1
        %v659 = vrot.slane %v348, 1
        %v660 = vsel %vm369, %v658, %v659
        %v661 = vrot.slane %v349, 1
        %v662 = vrot.slane %v350, 1
        %v663 = vsel %vm369, %v661, %v662
        %v664 = vrot.slane %v351, 1
        %v665 = vrot.slane %v352, 1
        %v666 = vsel %vm369, %v664, %v665
        %667 = vrot.lane.b32.xlu0 %v645, 112
        %v668 = vpop.permute.xlu0 %667
        %669 = vrot.lane.b32.xlu0 %v648, 112
        %v670 = vpop.permute.xlu0 %669
        %671 = vrot.lane.b32.xlu0 %v651, 112
        %v672 = vpop.permute.xlu0 %671
        %673 = vrot.lane.b32.xlu0 %v654, 112
        %v674 = vpop.permute.xlu0 %673
        %675 = vrot.lane.b32.xlu0 %v657, 112
        %v676 = vpop.permute.xlu0 %675
        %677 = vrot.lane.b32.xlu0 %v660, 112
        %v678 = vpop.permute.xlu0 %677
        %679 = vrot.lane.b32.xlu0 %v663, 112
        %v680 = vpop.permute.xlu0 %679
        %681 = vrot.lane.b32.xlu0 %v666, 112
        %v682 = vpop.permute.xlu0 %681
        %v691 = vrot.slane %v337, 2
        %v692 = vrot.slane %v338, 2
        %v693 = vsel %vm418, %v691, %v692
        %v694 = vrot.slane %v339, 2
        %v695 = vrot.slane %v340, 2
        %v696 = vsel %vm418, %v694, %v695
        %v697 = vrot.slane %v341, 2
        %v698 = vrot.slane %v342, 2
        %v699 = vsel %vm418, %v697, %v698
        %v700 = vrot.slane %v343, 2
        %v701 = vrot.slane %v344, 2
        %v702 = vsel %vm418, %v700, %v701
        %v703 = vrot.slane %v345, 2
        %v704 = vrot.slane %v346, 2
        %v705 = vsel %vm418, %v703, %v704
        %v706 = vrot.slane %v347, 2
        %v707 = vrot.slane %v348, 2
        %v708 = vsel %vm418, %v706, %v707
        %v709 = vrot.slane %v349, 2
        %v710 = vrot.slane %v350, 2
        %v711 = vsel %vm418, %v709, %v710
        %v712 = vrot.slane %v351, 2
        %v713 = vrot.slane %v352, 2
        %v714 = vsel %vm418, %v712, %v713
        %vm723 = vcmask 130048
        %v724 = vsel %vm723, %v265, %v395
        %v725 = vsel %vm723, %v267, %v397
        %v726 = vsel %vm723, %v269, %v399
        %v727 = vsel %vm723, %v271, %v401
        %v728 = vsel %vm723, %v273, %v403
        %v729 = vsel %vm723, %v275, %v405
        %v730 = vsel %vm723, %v277, %v407
        %v731 = vsel %vm723, %v279, %v409
        %vm732 = vcmask 261120
        %v733 = vsel %vm732, %v724, %v444
        %v734 = vsel %vm732, %v725, %v446
        %v735 = vsel %vm732, %v726, %v448
        %v736 = vsel %vm732, %v727, %v450
        %v737 = vsel %vm732, %v728, %v452
        %v738 = vsel %vm732, %v729, %v454
        %v739 = vsel %vm732, %v730, %v456
        %v740 = vsel %vm732, %v731, %v458
        %vm741 = vcmask 392192
        %v742 = vsel %vm741, %v733, %v476
        %v743 = vsel %vm741, %v734, %v478
        %v744 = vsel %vm741, %v735, %v480
        %v745 = vsel %vm741, %v736, %v482
        %v746 = vsel %vm741, %v737, %v484
        %v747 = vsel %vm741, %v738, %v486
        %v748 = vsel %vm741, %v739, %v488
        %v749 = vsel %vm741, %v740, %v490
        %vm750 = vcmask 523264
        %v751 = vsel %vm750, %v742, %v532
        %v752 = vsel %vm750, %v743, %v534
        %v753 = vsel %vm750, %v744, %v536
        %v754 = vsel %vm750, %v745, %v538
        %v755 = vsel %vm750, %v746, %v540
        %v756 = vsel %vm750, %v747, %v542
        %v757 = vsel %vm750, %v748, %v544
        %v758 = vsel %vm750, %v749, %v546
        %vm759 = vcmask 654336
        %v760 = vsel %vm759, %v751, %v580
        %v761 = vsel %vm759, %v752, %v582
        %v762 = vsel %vm759, %v753, %v584
        %v763 = vsel %vm759, %v754, %v586
        %v764 = vsel %vm759, %v755, %v588
        %v765 = vsel %vm759, %v756, %v590
        %v766 = vsel %vm759, %v757, %v592
        %v767 = vsel %vm759, %v758, %v594
        %vm768 = vcmask 785408
        %v769 = vsel %vm768, %v760, %v612
        %v770 = vsel %vm768, %v761, %v614
        %v771 = vsel %vm768, %v762, %v616
        %v772 = vsel %vm768, %v763, %v618
        %v773 = vsel %vm768, %v764, %v620
        %v774 = vsel %vm768, %v765, %v622
        %v775 = vsel %vm768, %v766, %v624
        %v776 = vsel %vm768, %v767, %v626
        %vm777 = vcmask 916480
        %v778 = vsel %vm777, %v769, %v668
        %v779 = vsel %vm777, %v770, %v670
        %v780 = vsel %vm777, %v771, %v672
        %v781 = vsel %vm777, %v772, %v674
        %v782 = vsel %vm777, %v773, %v676
        %v783 = vsel %vm777, %v774, %v678
        %v784 = vsel %vm777, %v775, %v680
        %v785 = vsel %vm777, %v776, %v682
        %v786 = vpack.c.bf16 %v779, %v778
        %v787 = vpack.c.bf16 %v696, %v693
        %v788 = vpack.c.bf16 %v781, %v780
        %v789 = vpack.c.bf16 %v702, %v699
        %v790 = vpack.c.bf16 %v783, %v782
        %v791 = vpack.c.bf16 %v708, %v705
        %v792 = vpack.c.bf16 %v785, %v784
        %v793 = vpack.c.bf16 %v714, %v711
        %v794 = vld [vmem:[%s1] sm:$0xf]
        %v795 = vld [vmem:[%s1 + $0x4] sm:$0xf]
        %v796 = vld [vmem:[%s1 + $0x8] sm:$0xf]
        %v797 = vld [vmem:[%s1 + $0xc] sm:$0xf]
        %v798 = vld [vmem:[%s1 + $0x10] sm:$0xf]
        %v799 = vld [vmem:[%s1 + $0x14] sm:$0xf]
        %v800 = vld [vmem:[%s1 + $0x18] sm:$0xf]
        %v801 = vld [vmem:[%s1 + $0x1c] sm:$0xf]
        %v802 = vld [vmem:[%s1 + $0x20] sm:$0xf]
        %v803 = vld [vmem:[%s1 + $0x24] sm:$0xf]
        %v804 = vld [vmem:[%s1 + $0x28] sm:$0xf]
        %v805 = vld [vmem:[%s1 + $0x2c] sm:$0xf]
        %v806 = vld [vmem:[%s1 + $0x30] sm:$0xf]
        %v807 = vld [vmem:[%s1 + $0x34] sm:$0xf]
        %v808 = vld [vmem:[%s1 + $0x38] sm:$0xf]
        %v809 = vld [vmem:[%s1 + $0x3c] sm:$0xf]
        %v810 = vld [vmem:[%s1 + $0x40] sm:$0xf]
        %v811 = vld [vmem:[%s1 + $0x44] sm:$0xf]
        %v812 = vld [vmem:[%s2] sm:$0x1]
        %v814 = vlaneseq
        %v815 = vshrl.u32 %v814, 7
        %v816 = vsub.s32 0, %v815
        %v817 = vrot.slane %v812, %v816
        %v837 = vunpack.c.l.b16 %v794
        %v838 = vunpack.c.l.b16 %v795
        %v839 = vunpack.c.l.b16 %v796
        %v840 = vunpack.c.l.b16 %v797
        %v841 = vunpack.c.l.b16 %v798
        %v842 = vunpack.c.l.b16 %v799
        %v843 = vunpack.c.l.b16 %v800
        %v844 = vunpack.c.l.b16 %v801
        %v845 = vunpack.c.l.b16 %v802
        %v846 = vunpack.c.l.b16 %v803
        %v847 = vunpack.c.l.b16 %v804
        %v848 = vunpack.c.l.b16 %v805
        %v849 = vunpack.c.l.b16 %v806
        %v850 = vunpack.c.l.b16 %v807
        %v851 = vunpack.c.l.b16 %v808
        %v852 = vunpack.c.l.b16 %v809
        %v853 = vunpack.c.l.b16 %v810
        %v854 = vunpack.c.l.b16 %v811
        %v855 = vpack.c.b16 %v838, %v837
        %v856 = vpack.c.b16 %v840, %v839
        %v857 = vpack.c.b16 %v842, %v841
        %v858 = vpack.c.b16 %v844, %v843
        %v859 = vpack.c.b16 %v846, %v845
        %v860 = vpack.c.b16 %v848, %v847
        %v861 = vpack.c.b16 %v850, %v849
        %v862 = vpack.c.b16 %v852, %v851
        %v863 = vpack.c.b16 %v854, %v853
        %v874 = vsel %vm723, %v787, 0
        %v877 = vsel %vm723, %v789, 0
        %v880 = vsel %vm723, %v791, 0
        %v883 = vsel %vm723, %v793, 0
        %885 = vmatprep.subr.bf16.mxu0 0
        %886 = vmatpush1.bf16.msra.mxu0 %v855
        %887 = vmatprep.subr.bf16.mxu0 0
        %888 = vmatpush1.bf16.msra.mxu0 %v856
        %889 = vmatprep.subr.bf16.mxu0 0
        %890 = vmatpush1.bf16.msra.mxu0 %v857
        %891 = vmatprep.subr.bf16.mxu0 0
        %892 = vmatpush1.bf16.msra.mxu0 %v858
        %893 = vmatprep.subr.bf16.mxu0 0
        %894 = vmatpush1.bf16.msra.mxu0 %v859
        %895 = vmatprep.subr.bf16.mxu0 0
        %896 = vmatpush1.bf16.msra.mxu0 %v860
        %897 = vmatprep.subr.bf16.mxu0 0
        %898 = vmatpush1.bf16.msra.mxu0 %v861
        %899 = vmatprep.subr.bf16.mxu0 0
        %900 = vmatpush1.bf16.msra.mxu0 %v862
        %901 = vmatprep.subr.bf16.mxu0 0
        %902 = vmatpush1.bf16.msra.mxu0 %v863
        %903 = vmatprep.subr.bf16.mxu0 0
        %904 = vmatpush1.bf16.msra.mxu0 0
        %905 = vmatprep.subr.bf16.mxu0 0
        %906 = vmatpush1.bf16.msra.mxu0 0
        %907 = vmatprep.subr.bf16.mxu0 0
        %908 = vmatpush1.bf16.msra.mxu0 0
        %909 = vmatprep.subr.bf16.mxu0 0
        %910 = vmatpush1.bf16.msra.mxu0 0
        %911 = vmatprep.subr.bf16.mxu0 0
        %912 = vmatpush1.bf16.msra.mxu0 0
        %913 = vmatprep.subr.bf16.mxu0 0
        %914 = vmatpush1.bf16.msra.mxu0 0
        %915 = vmatprep.subr.bf16.mxu0 0
        %916 = vmatpush1.bf16.msra.mxu0 0
        %917 = vmatprep.mubr.bf16.mxu0 %v874
        %918 = vmatmul.mubr.bf16.gmra.mrb[0].mxu0 %v786
        %v919 = vpop.f32.mrb[0].mxu0
        %v920 = vadd.f32 %v817, %v919
        %v921 = vpop.f32.mrb[0].mxu0
        %v922 = vpop.f32.mrb[0].mxu0
        %v923 = vadd.f32 %v817, %v922
        %v924 = vpop.f32.mrb[0].mxu0
        %925 = vmatprep.mubr.bf16.mxu0 %v877
        %926 = vmatmul.mubr.bf16.gmra.mrb[0].mxu0 %v788
        %v927 = vpop.f32.mrb[0].mxu0
        %v928 = vadd.f32 %v817, %v927
        %v929 = vpop.f32.mrb[0].mxu0
        %v930 = vpop.f32.mrb[0].mxu0
        %v931 = vadd.f32 %v817, %v930
        %v932 = vpop.f32.mrb[0].mxu0
        %933 = vmatprep.mubr.bf16.mxu0 %v880
        %934 = vmatmul.mubr.bf16.gmra.mrb[0].mxu0 %v790
        %v935 = vpop.f32.mrb[0].mxu0
        %v936 = vadd.f32 %v817, %v935
        %v937 = vpop.f32.mrb[0].mxu0
        %v938 = vpop.f32.mrb[0].mxu0
        %v939 = vadd.f32 %v817, %v938
        %v940 = vpop.f32.mrb[0].mxu0
        %941 = vmatprep.mubr.bf16.mxu0 %v883
        %942 = vmatmul.mubr.bf16.gmra.mrb[0].mxu0 %v792
        %v943 = vpop.f32.mrb[0].mxu0
        %v944 = vadd.f32 %v817, %v943
        %v945 = vpop.f32.mrb[0].mxu0
        %v946 = vpop.f32.mrb[0].mxu0
        %v947 = vadd.f32 %v817, %v946
        %v948 = vpop.f32.mrb[0].mxu0
        %949 = vdwg.mxu0
        %v950 = vmax.f32 %v920, 0.0
        %v951 = vmax.f32 %v923, 0.0
        %v952 = vmax.f32 %v928, 0.0
        %v953 = vmax.f32 %v931, 0.0
        %v954 = vmax.f32 %v936, 0.0
        %v955 = vmax.f32 %v939, 0.0
        %v956 = vmax.f32 %v944, 0.0
        %v957 = vmax.f32 %v947, 0.0
        %v958 = vpack.c.bf16 %v951, %v950
        %v959 = vpack.c.bf16 %v953, %v952
        %v960 = vpack.c.bf16 %v955, %v954
        %v961 = vpack.c.bf16 %v957, %v956
        %v962 = vld [vmem:[%s3] sm:$0xf]
        %v963 = vld [vmem:[%s3 + $0x4] sm:$0xf]
        %v964 = vld [vmem:[%s3 + $0x8] sm:$0xf]
        %v965 = vld [vmem:[%s3 + $0xc] sm:$0xf]
        %v966 = vld [vmem:[%s3 + $0x10] sm:$0xf]
        %v967 = vld [vmem:[%s3 + $0x14] sm:$0xf]
        %v968 = vld [vmem:[%s3 + $0x18] sm:$0xf]
        %v969 = vld [vmem:[%s3 + $0x1c] sm:$0xf]
        %v970 = vld [vmem:[%s3 + $0x20] sm:$0xf]
        %v971 = vld [vmem:[%s3 + $0x24] sm:$0xf]
        %v972 = vld [vmem:[%s3 + $0x28] sm:$0xf]
        %v973 = vld [vmem:[%s3 + $0x2c] sm:$0xf]
        %v974 = vld [vmem:[%s3 + $0x30] sm:$0xf]
        %v975 = vld [vmem:[%s3 + $0x34] sm:$0xf]
        %v976 = vld [vmem:[%s3 + $0x38] sm:$0xf]
        %v977 = vld [vmem:[%s3 + $0x3c] sm:$0xf]
        %v978 = vld [vmem:[%s4] sm:$0x1]
        %v980 = vlaneseq
        %v981 = vshrl.u32 %v980, 7
        %v982 = vsub.s32 0, %v981
        %v983 = vrot.slane %v978, %v982
        %v1001 = vunpack.c.l.b16 %v962
        %v1002 = vunpack.c.l.b16 %v963
        %v1003 = vunpack.c.l.b16 %v964
        %v1004 = vunpack.c.l.b16 %v965
        %v1005 = vunpack.c.l.b16 %v966
        %v1006 = vunpack.c.l.b16 %v967
        %v1007 = vunpack.c.l.b16 %v968
        %v1008 = vunpack.c.l.b16 %v969
        %v1009 = vunpack.c.l.b16 %v970
        %v1010 = vunpack.c.l.b16 %v971
        %v1011 = vunpack.c.l.b16 %v972
        %v1012 = vunpack.c.l.b16 %v973
        %v1013 = vunpack.c.l.b16 %v974
        %v1014 = vunpack.c.l.b16 %v975
        %v1015 = vunpack.c.l.b16 %v976
        %v1016 = vunpack.c.l.b16 %v977
        %v1017 = vpack.c.b16 %v1002, %v1001
        %v1018 = vpack.c.b16 %v1004, %v1003
        %v1019 = vpack.c.b16 %v1006, %v1005
        %v1020 = vpack.c.b16 %v1008, %v1007
        %v1021 = vpack.c.b16 %v1010, %v1009
        %v1022 = vpack.c.b16 %v1012, %v1011
        %v1023 = vpack.c.b16 %v1014, %v1013
        %v1024 = vpack.c.b16 %v1016, %v1015
        %1033 = vmatprep.subr.bf16.mxu0 0
        %1034 = vmatpush1.bf16.msra.mxu0 %v1017
        %1035 = vmatprep.subr.bf16.mxu0 0
        %1036 = vmatpush1.bf16.msra.mxu0 %v1018
        %1037 = vmatprep.subr.bf16.mxu0 0
        %1038 = vmatpush1.bf16.msra.mxu0 %v1019
        %1039 = vmatprep.subr.bf16.mxu0 0
        %1040 = vmatpush1.bf16.msra.mxu0 %v1020
        %1041 = vmatprep.subr.bf16.mxu0 0
        %1042 = vmatpush1.bf16.msra.mxu0 %v1021
        %1043 = vmatprep.subr.bf16.mxu0 0
        %1044 = vmatpush1.bf16.msra.mxu0 %v1022
        %1045 = vmatprep.subr.bf16.mxu0 0
        %1046 = vmatpush1.bf16.msra.mxu0 %v1023
        %1047 = vmatprep.subr.bf16.mxu0 0
        %1048 = vmatpush1.bf16.msra.mxu0 %v1024
        %1049 = vmatprep.subr.bf16.mxu0 0
        %1050 = vmatpush1.bf16.msra.mxu0 0
        %1051 = vmatprep.subr.bf16.mxu0 0
        %1052 = vmatpush1.bf16.msra.mxu0 0
        %1053 = vmatprep.subr.bf16.mxu0 0
        %1054 = vmatpush1.bf16.msra.mxu0 0
        %1055 = vmatprep.subr.bf16.mxu0 0
        %1056 = vmatpush1.bf16.msra.mxu0 0
        %1057 = vmatprep.subr.bf16.mxu0 0
        %1058 = vmatpush1.bf16.msra.mxu0 0
        %1059 = vmatprep.subr.bf16.mxu0 0
        %1060 = vmatpush1.bf16.msra.mxu0 0
        %1061 = vmatprep.subr.bf16.mxu0 0
        %1062 = vmatpush1.bf16.msra.mxu0 0
        %1063 = vmatprep.subr.bf16.mxu0 0
        %1064 = vmatpush1.bf16.msra.mxu0 0
        %1065 = vmatprep.mubr.bf16.mxu0 0
        %1066 = vmatmul.mubr.bf16.gmra.mrb[0].mxu0 %v958
        %v1067 = vpop.f32.mrb[0].mxu0
        %v1068 = vadd.f32 %v983, %v1067
        %v1069 = vpop.f32.mrb[0].mxu0
        %v1070 = vpop.f32.mrb[0].mxu0
        %v1071 = vadd.f32 %v983, %v1070
        %v1072 = vpop.f32.mrb[0].mxu0
        %1073 = vmatprep.mubr.bf16.mxu0 0
        %1074 = vmatmul.mubr.bf16.gmra.mrb[0].mxu0 %v959
        %v1075 = vpop.f32.mrb[0].mxu0
        %v1076 = vadd.f32 %v983, %v1075
        %v1077 = vpop.f32.mrb[0].mxu0
        %v1078 = vpop.f32.mrb[0].mxu0
        %v1079 = vadd.f32 %v983, %v1078
        %v1080 = vpop.f32.mrb[0].mxu0
        %1081 = vmatprep.mubr.bf16.mxu0 0
        %1082 = vmatmul.mubr.bf16.gmra.mrb[0].mxu0 %v960
        %v1083 = vpop.f32.mrb[0].mxu0
        %v1084 = vadd.f32 %v983, %v1083
        %v1085 = vpop.f32.mrb[0].mxu0
        %v1086 = vpop.f32.mrb[0].mxu0
        %v1087 = vadd.f32 %v983, %v1086
        %v1088 = vpop.f32.mrb[0].mxu0
        %1089 = vmatprep.mubr.bf16.mxu0 0
        %1090 = vmatmul.mubr.bf16.gmra.mrb[0].mxu0 %v961
        %v1091 = vpop.f32.mrb[0].mxu0
        %v1092 = vadd.f32 %v983, %v1091
        %v1093 = vpop.f32.mrb[0].mxu0
        %v1094 = vpop.f32.mrb[0].mxu0
        %v1095 = vadd.f32 %v983, %v1094
        %v1096 = vpop.f32.mrb[0].mxu0
        %1097 = vdwg.mxu0
        %v1098 = vlaneseq
        %v1099 = vand.u32 %v1098, 127
        %vm1100 = vcmp.ge.s32.totalorder %v1099, 54
        %vm1101 = vcmp.lt.s32.totalorder %v1099, 63
        %vm1102 = vmand %vm1100, %vm1101
        %v1103 = vxor.u32 %v1068, 2147483648
        %v1104 = vxor.u32 %v1071, 2147483648
        %v1105 = vxor.u32 %v1076, 2147483648
        %v1106 = vxor.u32 %v1079, 2147483648
        %v1107 = vxor.u32 %v1084, 2147483648
        %v1108 = vxor.u32 %v1087, 2147483648
        %v1109 = vxor.u32 %v1092, 2147483648
        %v1110 = vxor.u32 %v1095, 2147483648
        %v1111 = vmul.f32 %v1103, 1.442695
        %v1112 = vpow.pop %v1111
        %v1113 = vmul.f32 %v1104, 1.442695
        %v1114 = vpow.pop %v1113
        %v1115 = vmul.f32 %v1105, 1.442695
        %v1116 = vpow.pop %v1115
        %v1117 = vmul.f32 %v1106, 1.442695
        %v1118 = vpow.pop %v1117
        %v1119 = vmul.f32 %v1107, 1.442695
        %v1120 = vpow.pop %v1119
        %v1121 = vmul.f32 %v1108, 1.442695
        %v1122 = vpow.pop %v1121
        %v1123 = vmul.f32 %v1109, 1.442695
        %v1124 = vpow.pop %v1123
        %v1125 = vmul.f32 %v1110, 1.442695
        %v1126 = vpow.pop %v1125
        %v1127 = vadd.f32 %v1112, 1.0
        %v1128 = vadd.f32 %v1114, 1.0
        %v1129 = vadd.f32 %v1116, 1.0
        %v1130 = vadd.f32 %v1118, 1.0
        %v1131 = vadd.f32 %v1120, 1.0
        %v1132 = vadd.f32 %v1122, 1.0
        %v1133 = vadd.f32 %v1124, 1.0
        %v1134 = vadd.f32 %v1126, 1.0
        %v1135 = vrcp.pop %v1127
        %v1136 = vmul.f32 1.0, %v1135
        %v1137 = vrcp.pop %v1128
        %v1138 = vmul.f32 1.0, %v1137
        %v1139 = vrcp.pop %v1129
        %v1140 = vmul.f32 1.0, %v1139
        %v1141 = vrcp.pop %v1130
        %v1142 = vmul.f32 1.0, %v1141
        %v1143 = vrcp.pop %v1131
        %v1144 = vmul.f32 1.0, %v1143
        %v1145 = vrcp.pop %v1132
        %v1146 = vmul.f32 1.0, %v1145
        %v1147 = vrcp.pop %v1133
        %v1148 = vmul.f32 1.0, %v1147
        %v1149 = vrcp.pop %v1134
        %v1150 = vmul.f32 1.0, %v1149
        %v1151 = vsel %vm1102, 1, 0
        %vm1152 = vcmp.eq.s32.totalorder %v1151, 1
        %v1153 = vsel %vm1152, %v1136, %v1068
        %v1154 = vsel %vm1152, %v1138, %v1071
        %v1155 = vsel %vm1152, %v1140, %v1076
        %v1156 = vsel %vm1152, %v1142, %v1079
        %v1157 = vsel %vm1152, %v1144, %v1084
        %v1158 = vsel %vm1152, %v1146, %v1087
        %v1159 = vsel %vm1152, %v1148, %v1092
        %v1160 = vsel %vm1152, %v1150, %v1095
        %v1161 = vpack.c.bf16 %v1154, %v1153
        %v1162 = vpack.c.bf16 %v1156, %v1155
        %v1163 = vpack.c.bf16 %v1158, %v1157
        %v1164 = vpack.c.bf16 %v1160, %v1159
        %v1169 = vunpack.c.l.b16 %v1161
        %v1170 = vunpack.c.h.b16 %v1161
        %v1171 = vunpack.c.l.b16 %v1162
        %v1172 = vunpack.c.h.b16 %v1162
        %v1173 = vunpack.c.l.b16 %v1163
        %v1174 = vunpack.c.h.b16 %v1163
        %v1175 = vunpack.c.l.b16 %v1164
        %v1176 = vunpack.c.h.b16 %v1164
        %v1177 = vpack.c.b16 %v1169, %v1169
        %v1178 = vpack.c.b16 %v1170, %v1170
        %v1179 = vpack.c.b16 %v1171, %v1171
        %v1180 = vpack.c.b16 %v1172, %v1172
        %v1181 = vpack.c.b16 %v1173, %v1173
        %v1182 = vpack.c.b16 %v1174, %v1174
        %v1183 = vpack.c.b16 %v1175, %v1175
        %v1184 = vpack.c.b16 %v1176, %v1176
        %1193 = vst [vmem:[%s234] sm:$0xf] %v1177
        %1194 = vst [vmem:[%s234 + $0x4] sm:$0xf] %v1178
        %1195 = vst [vmem:[%s234 + $0x8] sm:$0xf] %v1179
        %1196 = vst [vmem:[%s234 + $0xc] sm:$0xf] %v1180
        %1197 = vst [vmem:[%s234 + $0x10] sm:$0xf] %v1181
        %1198 = vst [vmem:[%s234 + $0x14] sm:$0xf] %v1182
        %1199 = vst [vmem:[%s234 + $0x18] sm:$0xf] %v1183
        %1200 = vst [vmem:[%s234 + $0x1c] sm:$0xf] %v1184
        %s1201 = sand.u32 %s151, 1
        %s1202 = scalar_lea.sflag [#allocation3], %s1201
        %s1203 = sand.u32 %s151, 1
        %s1204 = smul.addr %s1203, 32
        %s1205 = scalar_lea.vmem [#allocation2], %s1204
        // Predicated region
        $region41: #{tpu_custom_call.1} parent=39 // pred_check
          %p1206 = pneg %p161
        $region42: #{tpu_custom_call.1} parent=39 // pred_check_branch
          %1208 = sbr.rel (%p1206) target = $region44
        $region43: #{tpu_custom_call.1} parent=39 // pred_region
          %s1209 = sadd.s32 %s23, %s24
          %s1210 = smul.u32 8, %s1209
          %s1212 = ssub.s32 512, 512
          %1213 = vsyncadd %s1202, %s1212
          %s1214 = smul.addr %s1210, 64
          %s1215 = scalar_lea.hbm %s5, %s1214
          %s1216 = sshll.u32 %s1205, 4
          %s1217 = int_to_ptr.vmem [resolvable:$true] %s1216
          %1222 = dma.vmem_to_hbm [thread:$0]  %s1217, 512, %s1215, %s1202, 64, 64, 4
        $region44: #{tpu_custom_call.1} parent=39 // pred_fallthru
          _
      $region40: #{tpu_custom_call.1} parent=5 // pred_fallthru
        _
      %p1223 = scmp.le.s32.totalorder 2, %s14
      // Predicated region
      $region45: #{tpu_custom_call.1} parent=5 // pred_check
        %p1224 = pneg %p1223
      $region46: #{tpu_custom_call.1} parent=5 // pred_check_branch
        %1226 = sbr.rel (%p1224) target = $region48
      $region47: #{tpu_custom_call.1} parent=5 // pred_region
        %s1227 = ssub.s32 %s14, 2
        // Predicated region
        $region49: #{tpu_custom_call.1} parent=47 // pred_check
          %p1228 = pneg %p167
        $region50: #{tpu_custom_call.1} parent=47 // pred_check_branch
          %1230 = sbr.rel (%p1228) target = $region52
        $region51: #{tpu_custom_call.1} parent=47 // pred_region
          %s1231 = sand.u32 %s152, 1
          %s1232 = scalar_lea.sflag [#allocation3], %s1231
          %s1233 = sand.u32 %s152, 1
          %s1234 = smul.addr %s1233, 32
          %s1235 = scalar_lea.vmem [#allocation2], %s1234
          %1236 = dma.done %s1232, 512
        $region52: #{tpu_custom_call.1} parent=47 // pred_fallthru
          _
      $region48: #{tpu_custom_call.1} parent=5 // pred_fallthru
        _
    $region6: #{tpu_custom_call.1} parent=1 // loop_footer
      %s18 = sadd.s32 1, %s14
    $region7: #{tpu_custom_call.1} parent=1 // loop_footer_branch
      %13 = sbr.rel target = $region3
    $region8: #{tpu_custom_call.1} parent=1 // loop_exit
      _
    %1237 = vsyncpa [#allocation3], 1
    %s1238 = scalar_lea.sflag [#allocation3], 1
    %1239 = vsyncpa %s1238, 1

</llo_original>
